<compile_context>
chip_gen: v6e
topology: v6e:2x2x1
jax: 0.10.0
libtpu: 0.0.40
codegen_flags: <defaults>
</compile_context>

<pallas_src>
import functools

import jax
import jax.numpy as jnp
from jax.experimental import pallas as pl
from jax.experimental.pallas import tpu as pltpu


def _conv1x1_nchw_kernel(x_ref, w_ref, b_ref, o_ref):
    # x_ref: (1, Cin, tHW)   input tile, spatial positions on lanes (NCHW order)
    # w_ref: (Cout, Cin)     1x1 conv weight
    # b_ref: (Cout, 1)       bias, broadcast along lanes
    # o_ref: (1, Cout, tHW)  lane-dense output tile
    acc = jnp.dot(w_ref[...], x_ref[0], preferred_element_type=jnp.float32)
    o_ref[0] = (acc + b_ref[...]).astype(o_ref.dtype)


def _pick_hw_tile(hw, n_batch, requested):
    """Pick the spatial (lane-dim) tile size."""
    t = min(requested, hw)
    if t < hw:
        # Lane-dim tiles that are not the full extent must be 128-multiples.
        t = max(128, (t // 128) * 128)
    # Megacore (v7x has 2 TCs): try to expose >= 2 grid steps when the batch
    # dimension alone does not provide them.
    if n_batch * pl.cdiv(hw, t) < 2 and hw >= 256:
        half = max(128, ((hw // 2) // 128) * 128)
        if half < hw:
            t = half
    return t


def conv1x1_nchw_pallas(x, w, b, *, hw_tile=2048):
    """Fused 1x1 conv + bias in native NCHW layout.

    x: (N, Cin, HW) f32, w: (Cout, Cin) f32, b: (Cout, 1) f32
    returns (N, Cout, HW) f32
    """
    N, Cin, HW = x.shape
    Cout = w.shape[0]
    t = _pick_hw_tile(HW, N, hw_tile)
    grid = (N, pl.cdiv(HW, t))

    cost = pl.CostEstimate(
        flops=2 * N * HW * Cin * Cout,
        transcendentals=0,
        bytes_accessed=4 * (N * HW * Cin + Cin * Cout + Cout + N * HW * Cout),
    )

    return pl.pallas_call(
        _conv1x1_nchw_kernel,
        out_shape=jax.ShapeDtypeStruct((N, Cout, HW), x.dtype),
        grid_spec=pltpu.PrefetchScalarGridSpec(
            num_scalar_prefetch=0,
            grid=grid,
            in_specs=[
                pl.BlockSpec((1, Cin, t), lambda n, j: (n, 0, j)),
                pl.BlockSpec((Cout, Cin), lambda n, j: (0, 0)),
                pl.BlockSpec((Cout, 1), lambda n, j: (0, 0)),
            ],
            out_specs=pl.BlockSpec((1, Cout, t), lambda n, j: (n, 0, j)),
        ),
        compiler_params=pltpu.CompilerParams(
            dimension_semantics=("parallel", "parallel"),
        ),
        cost_estimate=cost,
    )(x, w, b)


def landmark_head_forward(x_nchw, weight, bias, *, num_anchors=2, hw_tile=2048):
    """Full LandmarkHead forward.

    x_nchw: (N, Cin, H, W)
    weight: (Cout, Cin) or (Cout, Cin, 1, 1)  (PyTorch Conv2d weight)
    bias:   (Cout,)
    returns (N, H*W*num_anchors, 10)
    """
    N, Cin, H, W = x_nchw.shape
    Cout = weight.shape[0]
    assert Cout == num_anchors * 10

    HW = H * W
    x = x_nchw.reshape(N, Cin, HW)        # free reshape, native layout kept
    w = weight.reshape(Cout, Cin)         # handles (Cout,Cin,1,1) and (Cout,Cin)
    b = bias.reshape(Cout, 1)

    out_cm = conv1x1_nchw_pallas(x, w, b, hw_tile=hw_tile)   # (N, Cout, HW)

    # Small transpose on the 20-channel output only (much cheaper than
    # transposing the 64-channel input); then a free reshape matches
    # permute(0,2,3,1).view(N, -1, 10).
    out = jnp.transpose(out_cm, (0, 2, 1))                   # (N, HW, Cout)
    return out.reshape(N, HW * num_anchors, 10)


def reference_forward(x_nchw, weight, bias, *, num_anchors=2):
    """Pure-JAX reference matching the PyTorch module."""
    N, Cin, H, W = x_nchw.shape
    w = weight.reshape(num_anchors * 10, Cin)
    out = jnp.einsum("nchw,oc->nohw", x_nchw, w) + bias[None, :, None, None]
    out = jnp.transpose(out, (0, 2, 3, 1))  # NCHW -> NHWC
    return out.reshape(N, -1, 10)


if __name__ == "__main__":
    num_anchors = 2
    Cin = 64
    Cout = num_anchors * 10

    key = jax.random.PRNGKey(0)
    kx, kw, kb, kx2 = jax.random.split(key, 4)

    # Conv2d params in PyTorch layout (Cout, Cin, 1, 1).
    weight = jax.random.normal(kw, (Cout, Cin, 1, 1), dtype=jnp.float32) * 0.02
    bias = jax.random.normal(kb, (Cout,), dtype=jnp.float32) * 0.01

    # Case 1: small shapes consistent with the module (batch=2, 64ch, 8x8).
    N, H, W = 2, 8, 8
    x = jax.random.normal(kx, (N, Cin, H, W), dtype=jnp.float32)
    fwd = jax.jit(functools.partial(landmark_head_forward, num_anchors=num_anchors))
    out = jax.block_until_ready(fwd(x, weight, bias))
    ref = reference_forward(x, weight, bias, num_anchors=num_anchors)
    assert out.shape == (N, H * W * num_anchors, 10), out.shape
    assert jnp.allclose(out, ref, atol=1e-5, rtol=1e-5), "case 1 mismatch vs reference"

    # Case 2: spatial size not a multiple of the tile (H*W=400, tile forced to
    # 128 -> cdiv grid with a masked tail), exercising the robustness fix.
    N2, H2, W2 = 1, 20, 20
    x2 = jax.random.normal(kx2, (N2, Cin, H2, W2), dtype=jnp.float32)
    fwd2 = jax.jit(functools.partial(landmark_head_forward,
                                     num_anchors=num_anchors, hw_tile=128))
    out2 = jax.block_until_ready(fwd2(x2, weight, bias))
    ref2 = reference_forward(x2, weight, bias, num_anchors=num_anchors)
    assert out2.shape == (N2, H2 * W2 * num_anchors, 10), out2.shape
    assert jnp.allclose(out2, ref2, atol=1e-5, rtol=1e-5), "case 2 mismatch vs reference"

    print("KERNEL_OK")
</pallas_src>

<mosaic_0001>
module attributes {stable_mosaic.version = 11 : i64} {
  func.func @_conv1x1_nchw_kernel(%arg0: i32, %arg1: i32, %arg2: memref<1x64x64xf32, #tpu.memory_space<vmem>>, %arg3: memref<20x64xf32, #tpu.memory_space<vmem>>, %arg4: memref<20x1xf32, #tpu.memory_space<vmem>>, %arg5: memref<1x20x64xf32, #tpu.memory_space<vmem>>) attributes {dimension_semantics = [#tpu.dimension_semantics<parallel>, #tpu.dimension_semantics<parallel>], iteration_bounds = array<i64: 2, 1>, scalar_prefetch = 0 : i64, scratch_operands = 0 : i64, tpu.core_type = #tpu.core_type<tc>, window_params = [{transform_indices = @transform_0, window_bounds = array<i64: 1, 64, 64>}, {pipeline_mode = #tpu.pipeline_mode<synchronous>, transform_indices = @transform_1, window_bounds = array<i64: 20, 64>}, {pipeline_mode = #tpu.pipeline_mode<synchronous>, transform_indices = @transform_2, window_bounds = array<i64: 20, 1>}, {transform_indices = @transform_3, window_bounds = array<i64: 1, 20, 64>}]} {
    %c0 = arith.constant 0 : index
    %c0_0 = arith.constant 0 : index
    %0 = vector.load %arg3[%c0, %c0_0] : memref<20x64xf32, #tpu.memory_space<vmem>>, vector<20x64xf32>
    %c0_1 = arith.constant 0 : index
    %c0_2 = arith.constant 0 : index
    %c0_3 = arith.constant 0 : index
    %1 = vector.load %arg2[%c0_1, %c0_2, %c0_3] : memref<1x64x64xf32, #tpu.memory_space<vmem>>, vector<1x64x64xf32>
    %2 = vector.shape_cast %1 : vector<1x64x64xf32> to vector<64x64xf32>
    %cst = arith.constant dense<0.000000e+00> : vector<20x64xf32>
    %3 = tpu.matmul %0, %2, %cst {dimension_numbers = #tpu.dot_dimension_numbers<[1], [0], [0], [1], [0, 0, 1, 1], [], []>} : vector<20x64xf32>, vector<64x64xf32>, vector<20x64xf32> -> vector<20x64xf32>
    %c0_4 = arith.constant 0 : index
    %c0_5 = arith.constant 0 : index
    %4 = vector.load %arg4[%c0_4, %c0_5] : memref<20x1xf32, #tpu.memory_space<vmem>>, vector<20x1xf32>
    %5 = vector.broadcast %4 : vector<20x1xf32> to vector<20x64xf32>
    %6 = arith.addf %3, %5 : vector<20x64xf32>
    %c0_6 = arith.constant 0 : index
    %c0_7 = arith.constant 0 : index
    %c0_8 = arith.constant 0 : index
    %7 = vector.load %arg5[%c0_6, %c0_7, %c0_8] : memref<1x20x64xf32, #tpu.memory_space<vmem>>, vector<1x20x64xf32>
    %8 = vector.shape_cast %7 : vector<1x20x64xf32> to vector<20x64xf32>
    %9 = vector.shape_cast %6 : vector<20x64xf32> to vector<1x20x64xf32>
    tpu.vector_store %arg5[%c0_6, %c0_7, %c0_8], %9 {strides = array<i32>} : memref<1x20x64xf32, #tpu.memory_space<vmem>>, vector<1x20x64xf32>,
    return
  }
  func.func @transform_0(%arg0: i32, %arg1: i32) -> (i32, i32, i32) {
    %c0_i32 = arith.constant 0 : i32
    %c0_i32_0 = arith.constant 0 : i32
    return %arg0, %c0_i32, %arg1 : i32, i32, i32
  }
  func.func @transform_1(%arg0: i32, %arg1: i32) -> (i32, i32) {
    %c0_i32 = arith.constant 0 : i32
    %c0_i32_0 = arith.constant 0 : i32
    %c0_i32_1 = arith.constant 0 : i32
    return %c0_i32, %c0_i32_0 : i32, i32
  }
  func.func @transform_2(%arg0: i32, %arg1: i32) -> (i32, i32) {
    %c0_i32 = arith.constant 0 : i32
    %c0_i32_0 = arith.constant 0 : i32
    %c0_i32_1 = arith.constant 0 : i32
    return %c0_i32, %c0_i32_0 : i32, i32
  }
  func.func @transform_3(%arg0: i32, %arg1: i32) -> (i32, i32, i32) {
    %c0_i32 = arith.constant 0 : i32
    %c0_i32_0 = arith.constant 0 : i32
    return %arg0, %c0_i32, %arg1 : i32, i32, i32
  }
}

</mosaic_0001>

<llo_original>
// kernel: landmark_head_forward.1
$region0: #{landmark_head_forward.1}
  #allocation0 [shape = 'u32[]', space=smem, size = 0x4, offset = 0x4, fixed_abs, tag = 'smem constant byte address 0x4 - core index']
  #allocation1 [shape = 'u32[144,128]{1,0:T(1,128)}', space=vmem, size = 0x12000, scoped, tag = 'internal scratch']
  %s0 = inlined_call_operand.vmem [shape: f32[2,64,64], index: 0, kind: input, shape index: {}]
  %s1 = inlined_call_operand.vmem [shape: f32[20,64], index: 1, kind: input, shape index: {}]
  %s2 = inlined_call_operand.vmem [shape: f32[20,1], index: 2, kind: input, shape index: {}]
  %s3 = inlined_call_operand.vmem [shape: f32[2,20,64], index: 3, kind: output, shape index: {}]
  %s4 = sld [smem:[#allocation0]]
  $region45: #{landmark_head_forward.1} parent=0
    _
  %s6 = ssub.s32 1, %s4
  %s7 = scalar_select 0, %s6, %s4
  loop: start=0, step=1, limit=4
  $region2: #{landmark_head_forward.1} parent=0 // loop_pre_header
    _
  $region3: #{landmark_head_forward.1} parent=0 // loop_header
    %s9 = sphi 0, %s13
    %p10 = scmp.ge.s32.totalorder %s9, 4
    %s16 = sphi 0, %s28
    %s17 = sphi 0, %s24
    %s18 = sphi 0, %s16
    %s19 = sphi 0, %s17
    %s20 = sphi 0, %s18
    %s21 = sphi 0, %s19
    %s33 = sphi 0, %s35
    %s36 = sphi 0, %s33
    %s37 = sphi 0, %s36
    %s53 = sphi 0, %s37
    %s57 = sphi 0, %s57
    %s59 = sphi 0, %s57
    %s60 = sphi 0, %s59
    %s74 = sphi 0, %s60
    %s78 = sphi 0, %s78
    %s80 = sphi 0, %s78
    %s81 = sphi 0, %s80
    %s95 = sphi 0, %s81
    %s103 = sphi 0, %s105
    %s106 = sphi 0, %s103
    %s107 = sphi 0, %s106
    %s123 = sphi 0, %s107
  $region4: #{landmark_head_forward.1} parent=0 // loop_header_branch
    %12 = sbr.rel (%p10) target = $region8
  $region5: #{landmark_head_forward.1} parent=0 // loop_body
    %s14 = ssub.s32 %s9, 1
    %s15 = ssub.s32 %s9, 2
    %s22 = sadd.s32 1, %s17
    %p23 = scmp.ge.s32.totalorder %s22, 1
    %s24 = scalar_select %p23, 0, %s22
    %s25 = sadd.s32 1, %s16
    %s26 = scalar_select %p23, %s25, %s16
    %p27 = scmp.ge.s32.totalorder %s26, 2
    %s28 = scalar_select %p27, 0, %s26
    %s29 = ssub.s32 %s16, %s28
    %s30 = ssub.s32 %s17, %s24
    %s31 = sor.u32 %s29, %s30
    %p32 = scmp.eq.s32.totalorder %s31, 0
    %s34 = sadd.s32 %s33, 1
    %s35 = scalar_select %p32, %s33, %s34
    %p38 = pneg %p32
    %p39 = scmp.eq.s32.totalorder %s9, 1
    %p40 = por %p38, %p39
    %p41 = scmp.ne.s32.totalorder %s33, %s36
    %p42 = scmp.eq.s32.totalorder %s9, 0
    %p43 = por %p41, %p42
    %p44 = scmp.ne.s32.totalorder %s33, %s36
    %p45 = scmp.eq.s32.totalorder %s14, 1
    %p46 = por %p44, %p45
    %p47 = scmp.ne.s32.totalorder %s36, %s37
    %p48 = scmp.eq.s32.totalorder %s14, 0
    %p49 = por %p47, %p48
    %p50 = scmp.ne.s32.totalorder %s36, %s37
    %p51 = scmp.eq.s32.totalorder %s15, 1
    %p52 = por %p50, %p51
    %p54 = scmp.ne.s32.totalorder %s37, %s53
    %p55 = scmp.eq.s32.totalorder %s15, 0
    %p56 = por %p54, %p55
    %s58 = sadd.s32 %s57, 1
    %p61 = scmp.eq.s32.totalorder %s9, 1
    %p62 = scmp.ne.s32.totalorder %s57, %s59
    %p63 = scmp.eq.s32.totalorder %s9, 0
    %p64 = por %p62, %p63
    %p65 = scmp.ne.s32.totalorder %s57, %s59
    %p66 = scmp.eq.s32.totalorder %s14, 1
    %p67 = por %p65, %p66
    %p68 = scmp.ne.s32.totalorder %s59, %s60
    %p69 = scmp.eq.s32.totalorder %s14, 0
    %p70 = por %p68, %p69
    %p71 = scmp.ne.s32.totalorder %s59, %s60
    %p72 = scmp.eq.s32.totalorder %s15, 1
    %p73 = por %p71, %p72
    %p75 = scmp.ne.s32.totalorder %s60, %s74
    %p76 = scmp.eq.s32.totalorder %s15, 0
    %p77 = por %p75, %p76
    %s79 = sadd.s32 %s78, 1
    %p82 = scmp.eq.s32.totalorder %s9, 1
    %p83 = scmp.ne.s32.totalorder %s78, %s80
    %p84 = scmp.eq.s32.totalorder %s9, 0
    %p85 = por %p83, %p84
    %p86 = scmp.ne.s32.totalorder %s78, %s80
    %p87 = scmp.eq.s32.totalorder %s14, 1
    %p88 = por %p86, %p87
    %p89 = scmp.ne.s32.totalorder %s80, %s81
    %p90 = scmp.eq.s32.totalorder %s14, 0
    %p91 = por %p89, %p90
    %p92 = scmp.ne.s32.totalorder %s80, %s81
    %p93 = scmp.eq.s32.totalorder %s15, 1
    %p94 = por %p92, %p93
    %p96 = scmp.ne.s32.totalorder %s81, %s95
    %p97 = scmp.eq.s32.totalorder %s15, 0
    %p98 = por %p96, %p97
    %s99 = ssub.s32 %s16, %s28
    %s100 = ssub.s32 %s17, %s24
    %s101 = sor.u32 %s99, %s100
    %p102 = scmp.eq.s32.totalorder %s101, 0
    %s104 = sadd.s32 %s103, 1
    %s105 = scalar_select %p102, %s103, %s104
    %p108 = pneg %p102
    %p109 = scmp.eq.s32.totalorder %s9, 1
    %p110 = por %p108, %p109
    %p111 = scmp.ne.s32.totalorder %s103, %s106
    %p112 = scmp.eq.s32.totalorder %s9, 0
    %p113 = por %p111, %p112
    %p114 = scmp.ne.s32.totalorder %s103, %s106
    %p115 = scmp.eq.s32.totalorder %s14, 1
    %p116 = por %p114, %p115
    %p117 = scmp.ne.s32.totalorder %s106, %s107
    %p118 = scmp.eq.s32.totalorder %s14, 0
    %p119 = por %p117, %p118
    %p120 = scmp.ne.s32.totalorder %s106, %s107
    %p121 = scmp.eq.s32.totalorder %s15, 1
    %p122 = por %p120, %p121
    %p124 = scmp.ne.s32.totalorder %s107, %s123
    %p125 = scmp.eq.s32.totalorder %s15, 0
    %p126 = por %p124, %p125
    %p127 = scmp.le.s32.totalorder 1, %s9
    %p128 = scmp.lt.s32.totalorder %s9, 3
    %p129 = pnand %p127, %p128
    %p130 = pneg %p129
    // Predicated region
    $region9: #{landmark_head_forward.1} parent=5 // pred_check
      _
    $region10: #{landmark_head_forward.1} parent=5 // pred_check_branch
      %132 = sbr.rel (%p129) target = $region12
    $region11: #{landmark_head_forward.1} parent=5 // pred_region
      %s133 = ssub.s32 %s9, 1
      // Predicated region
      $region13: #{landmark_head_forward.1} parent=11 // pred_check
        %p134 = pneg %p70
      $region14: #{landmark_head_forward.1} parent=11 // pred_check_branch
        %136 = sbr.rel (%p134) target = $region16
      $region15: #{landmark_head_forward.1} parent=11 // pred_region
        _
      $region16: #{landmark_head_forward.1} parent=11 // pred_fallthru
        _
      // Predicated region
      $region17: #{landmark_head_forward.1} parent=11 // pred_check
        %p137 = pneg %p91
      $region18: #{landmark_head_forward.1} parent=11 // pred_check_branch
        %139 = sbr.rel (%p137) target = $region20
      $region19: #{landmark_head_forward.1} parent=11 // pred_region
        _
      $region20: #{landmark_head_forward.1} parent=11 // pred_fallthru
        _
    $region12: #{landmark_head_forward.1} parent=5 // pred_fallthru
      _
    %p140 = scmp.lt.s32.totalorder %s9, 2
    // Predicated region
    $region21: #{landmark_head_forward.1} parent=5 // pred_check
      %p141 = pneg %p140
    $region22: #{landmark_head_forward.1} parent=5 // pred_check_branch
      %143 = sbr.rel (%p141) target = $region24
    $region23: #{landmark_head_forward.1} parent=5 // pred_region
      // Predicated region
      $region25: #{landmark_head_forward.1} parent=23 // pred_check
        %p144 = pneg %p43
      $region26: #{landmark_head_forward.1} parent=23 // pred_check_branch
        %146 = sbr.rel (%p144) target = $region28
      $region27: #{landmark_head_forward.1} parent=23 // pred_region
        %p147 = scmp.lt.s32.totalorder %s16, 1
        %s148 = scalar_select %p147, %s16, 1
        %p149 = scmp.lt.s32.totalorder %s17, 0
        %s150 = scalar_select %p149, %s17, 0
        %s151 = smul.addr %s148, 8
        %s152 = sadd.s32 %s150, %s151
        %s153 = smul.addr %s152, 8
        %s154 = scalar_lea.vmem %s0, %s153
      $region28: #{landmark_head_forward.1} parent=23 // pred_fallthru
        _
    $region24: #{landmark_head_forward.1} parent=5 // pred_fallthru
      _
    %p155 = scmp.le.s32.totalorder 1, %s9
    %p156 = scmp.lt.s32.totalorder %s9, 3
    %p157 = pnand %p155, %p156
    %p158 = pneg %p157
    // Predicated region
    $region29: #{landmark_head_forward.1} parent=5 // pred_check
      _
    $region30: #{landmark_head_forward.1} parent=5 // pred_check_branch
      %160 = sbr.rel (%p157) target = $region32
    $region31: #{landmark_head_forward.1} parent=5 // pred_region
      %s161 = ssub.s32 %s9, 1
      %p162 = scmp.lt.s32.totalorder %s18, 1
      %s163 = scalar_select %p162, %s18, 1
      %p164 = scmp.lt.s32.totalorder %s19, 0
      %s165 = scalar_select %p164, %s19, 0
      %s166 = smul.addr %s163, 8
      %s167 = sadd.s32 %s165, %s166
      %s168 = smul.addr %s167, 8
      %s169 = scalar_lea.vmem %s0, %s168
      %p170 = pneg %p49
      %p171 = pneg %p46
      %p172 = pneg %p70
      %p173 = pneg %p67
      %p174 = pneg %p91
      %p175 = pneg %p88
      %p176 = pneg %p119
      %p177 = pneg %p116
      %p178 = scmp.lt.s32.totalorder %s18, 1
      %s179 = scalar_select %p178, %s18, 1
      %p180 = scmp.lt.s32.totalorder %s19, 0
      %s181 = scalar_select %p180, %s19, 0
      %s182 = smul.addr %s179, 3
      %s183 = sadd.s32 %s181, %s182
      %s184 = smul.addr %s183, 8
      %s185 = scalar_lea.vmem %s3, %s184
      %p186 = scmp.lt.s32.totalorder %s18, 1
      %s187 = scalar_select %p186, %s18, 1
      %p188 = scmp.lt.s32.totalorder %s19, 0
      %s189 = scalar_select %p188, %s19, 0
      %s190 = smul.addr %s187, 8
      %s191 = sadd.s32 %s189, %s190
      %s192 = smul.addr %s191, 8
      %s193 = scalar_lea.vmem %s0, %s192
      %p194 = scmp.lt.s32.totalorder %s18, 1
      %s195 = scalar_select %p194, %s18, 1
      %p196 = scmp.lt.s32.totalorder %s19, 0
      %s197 = scalar_select %p196, %s19, 0
      %s198 = smul.addr %s195, 3
      %s199 = sadd.s32 %s197, %s198
      %s200 = smul.addr %s199, 8
      %s201 = scalar_lea.vmem %s3, %s200
      %v202 = vld [vmem:[%s1] sm:$0xff]
      %v203 = vld [vmem:[%s1 + $0x8] sm:$0xff]
      %v204 = vld [vmem:[%s1 + $0x10] sm:$0xf]
      %v205 = vld [vmem:[%s193] sm:$0xff]
      %v206 = vld [vmem:[%s193 + $0x8] sm:$0xff]
      %v207 = vld [vmem:[%s193 + $0x10] sm:$0xff]
      %v208 = vld [vmem:[%s193 + $0x18] sm:$0xff]
      %v209 = vld [vmem:[%s193 + $0x20] sm:$0xff]
      %v210 = vld [vmem:[%s193 + $0x28] sm:$0xff]
      %v211 = vld [vmem:[%s193 + $0x30] sm:$0xff]
      %v212 = vld [vmem:[%s193 + $0x38] sm:$0xff]
      %v213 = vld [vmem:[%s2] sm:$0xff]
      %v214 = vld [vmem:[%s2 + $0x8] sm:$0xff]
      %v215 = vld [vmem:[%s2 + $0x10] sm:$0xf]
      %217 = vset.pattern.permute.xlu0 0
      %218 = vperm.xlu0 %217, %v213
      %v219 = vpop.permute.xlu0 %218
      %222 = vset.pattern.permute.xlu0 0
      %223 = vperm.xlu0 %222, %v214
      %v224 = vpop.permute.xlu0 %223
      %227 = vset.pattern.permute.xlu0 0
      %228 = vperm.xlu0 %227, %v215
      %v229 = vpop.permute.xlu0 %228
      %vm231 = vcmask 523264
      %v233 = vsel %vm231, %v202, 0
      %v236 = vsel %vm231, %v203, 0
      %v239 = vsel %vm231, %v204, 0
      %241 = vmatprep.subr.mxu0 0.0
      %242 = vmatpush1.msra.mxu0 0.0
      %243 = vmatprep.subr.mxu0 0.0
      %244 = vmatpush1.msra.mxu0 0.0
      %245 = vmatprep.subr.mxu0 0.0
      %246 = vmatpush1.msra.mxu0 0.0
      %247 = vmatprep.subr.mxu0 0.0
      %248 = vmatpush1.msra.mxu0 0.0
      %249 = vmatprep.subr.mxu0 0.0
      %250 = vmatpush1.msra.mxu0 0.0
      %251 = vmatprep.subr.mxu0 0.0
      %252 = vmatpush1.msra.mxu0 0.0
      %253 = vmatprep.subr.mxu0 0.0
      %254 = vmatpush1.msra.mxu0 0.0
      %255 = vmatprep.subr.mxu0 0.0
      %256 = vmatpush1.msra.mxu0 0.0
      %257 = vmatprep.subr.mxu0 0.0
      %258 = vmatpush1.msra.mxu0 %v212
      %259 = vmatprep.subr.mxu0 0.0
      %260 = vmatpush1.msra.mxu0 %v211
      %261 = vmatprep.subr.mxu0 0.0
      %262 = vmatpush1.msra.mxu0 %v210
      %263 = vmatprep.subr.mxu0 0.0
      %264 = vmatpush1.msra.mxu0 %v209
      %265 = vmatprep.subr.mxu0 0.0
      %266 = vmatpush1.msra.mxu0 %v208
      %267 = vmatprep.subr.mxu0 0.0
      %268 = vmatpush1.msra.mxu0 %v207
      %269 = vmatprep.subr.mxu0 0.0
      %270 = vmatpush1.msra.mxu0 %v206
      %271 = vmatprep.subr.mxu0 0.0
      %272 = vmatpush1.msra.mxu0 %v205
      %273 = vmatprep.subr.mxu0 0.0
      %274 = vmatpush2.msra.mxu0 0.0
      %275 = vmatprep.subr.mxu0 0.0
      %276 = vmatpush2.msra.mxu0 0.0
      %277 = vmatprep.subr.mxu0 0.0
      %278 = vmatpush2.msra.mxu0 0.0
      %279 = vmatprep.subr.mxu0 0.0
      %280 = vmatpush2.msra.mxu0 0.0
      %281 = vmatprep.subr.mxu0 0.0
      %282 = vmatpush2.msra.mxu0 0.0
      %283 = vmatprep.subr.mxu0 0.0
      %284 = vmatpush2.msra.mxu0 0.0
      %285 = vmatprep.subr.mxu0 0.0
      %286 = vmatpush2.msra.mxu0 0.0
      %287 = vmatprep.subr.mxu0 0.0
      %288 = vmatpush2.msra.mxu0 0.0
      %289 = vmatprep.subr.mxu0 0.0
      %290 = vmatpush2.msra.mxu0 0.0
      %291 = vmatprep.subr.mxu0 0.0
      %292 = vmatpush2.msra.mxu0 0.0
      %293 = vmatprep.subr.mxu0 0.0
      %294 = vmatpush2.msra.mxu0 0.0
      %295 = vmatprep.subr.mxu0 0.0
      %296 = vmatpush2.msra.mxu0 0.0
      %297 = vmatprep.subr.mxu0 0.0
      %298 = vmatpush2.msra.mxu0 0.0
      %299 = vmatprep.subr.mxu0 0.0
      %300 = vmatpush2.msra.mxu0 0.0
      %301 = vmatprep.subr.mxu0 0.0
      %302 = vmatpush2.msra.mxu0 0.0
      %303 = vmatprep.subr.mxu0 0.0
      %304 = vmatpush2.msra.mxu0 0.0
      %305 = vmatprep.mubr.f32.mxu0 0.0
      %306 = vmatmul.mubr.f32.gmra.mxu0 %v233
      %v307 = vpop.f32.mrf.mxu0
      %v308 = vadd.f32 %v219, %v307
      %v309 = vpop.f32.mrf.mxu0
      %310 = vmatprep.mubr.f32.mxu0 0.0
      %311 = vmatmul.mubr.f32.gmra.mxu0 %v236
      %v312 = vpop.f32.mrf.mxu0
      %v313 = vadd.f32 %v224, %v312
      %v314 = vpop.f32.mrf.mxu0
      %315 = vmatprep.mubr.f32.mxu0 0.0
      %316 = vmatmul.mubr.f32.gmra.mxu0 %v239
      %v317 = vpop.f32.mrf.mxu0
      %v318 = vadd.f32 %v229, %v317
      %v319 = vpop.f32.mrf.mxu0
      %320 = vdwg.mxu0
      %321 = vst.msk [vmem:[%s201] sm:$0xff] %vm231, %v308
      %322 = vst.msk [vmem:[%s201 + $0x8] sm:$0xff] %vm231, %v313
      %vm323 = vcmask 519168
      %324 = vst.msk [vmem:[%s201 + $0x10] sm:$0xf] %vm323, %v318
      %p325 = scmp.lt.s32.totalorder %s18, 1
      %s326 = scalar_select %p325, %s18, 1
      %p327 = scmp.lt.s32.totalorder %s19, 0
      %s328 = scalar_select %p327, %s19, 0
      %s329 = smul.addr %s326, 3
      %s330 = sadd.s32 %s328, %s329
      %s331 = smul.addr %s330, 8
      %s332 = scalar_lea.vmem %s3, %s331
      // Predicated region
      $region33: #{landmark_head_forward.1} parent=31 // pred_check
        %p333 = pneg %p116
      $region34: #{landmark_head_forward.1} parent=31 // pred_check_branch
        %335 = sbr.rel (%p333) target = $region36
      $region35: #{landmark_head_forward.1} parent=31 // pred_region
        _
      $region36: #{landmark_head_forward.1} parent=31 // pred_fallthru
        _
    $region32: #{landmark_head_forward.1} parent=5 // pred_fallthru
      _
    %p336 = scmp.le.s32.totalorder 2, %s9
    // Predicated region
    $region37: #{landmark_head_forward.1} parent=5 // pred_check
      %p337 = pneg %p336
    $region38: #{landmark_head_forward.1} parent=5 // pred_check_branch
      %339 = sbr.rel (%p337) target = $region40
    $region39: #{landmark_head_forward.1} parent=5 // pred_region
      %s340 = ssub.s32 %s9, 2
      // Predicated region
      $region41: #{landmark_head_forward.1} parent=39 // pred_check
        %p341 = pneg %p122
      $region42: #{landmark_head_forward.1} parent=39 // pred_check_branch
        %343 = sbr.rel (%p341) target = $region44
      $region43: #{landmark_head_forward.1} parent=39 // pred_region
        %p344 = scmp.lt.s32.totalorder %s20, 1
        %s345 = scalar_select %p344, %s20, 1
        %p346 = scmp.lt.s32.totalorder %s21, 0
        %s347 = scalar_select %p346, %s21, 0
        %s348 = smul.addr %s345, 3
        %s349 = sadd.s32 %s347, %s348
        %s350 = smul.addr %s349, 8
        %s351 = scalar_lea.vmem %s3, %s350
      $region44: #{landmark_head_forward.1} parent=39 // pred_fallthru
        _
    $region40: #{landmark_head_forward.1} parent=5 // pred_fallthru
      _
  $region6: #{landmark_head_forward.1} parent=0 // loop_footer
    %s13 = sadd.s32 1, %s9
  $region7: #{landmark_head_forward.1} parent=0 // loop_footer_branch
    %8 = sbr.rel target = $region3
  $region8: #{landmark_head_forward.1} parent=0 // loop_exit
    _

</llo_original>
